<compile_context>
chip_gen: v6e
topology: v6e:2x2x1
jax: 0.10.0
libtpu: 0.0.40
codegen_flags: <defaults>
</compile_context>

<pallas_src>
import functools

import jax
import jax.numpy as jnp
from jax.experimental import pallas as pl
from jax.experimental.pallas import tpu as pltpu


def _label_smoothing_kernel(x_ref, t_ref, o_ref, *, confidence, smoothing,
                            n_rows, block_rows, row_chunk):
    """One (TM, C) row-block per grid step -> one (8, 128) partial-sum tile."""
    tm = block_rows
    c = x_ref.shape[-1]
    uni = smoothing / c
    base = pl.program_id(0) * tm

    def chunk_loss_sum(r0, r):
        # Process `r` rows starting at local row `r0`; all intermediates are
        # (r, C) f32 (bounded by the row_chunk budget), never (TM, C).
        xr = x_ref[pl.ds(r0, r), :].astype(jnp.float32)          # (r, C)
        tg = t_ref[pl.ds(r0, r), :]                               # (r, 1) i32
        m = jnp.max(xr, axis=-1, keepdims=True)                   # (r, 1)
        # Fused weighted reduction: w_j = smoothing/C + confidence*[j==tgt].
        col = jax.lax.broadcasted_iota(jnp.int32, (r, c), 1)
        w = jnp.where(col == tg, confidence + uni, uni)
        s_exp = jnp.sum(jnp.exp(xr - m), axis=-1, keepdims=True)  # (r, 1)
        s_wx = jnp.sum(w * xr, axis=-1, keepdims=True)            # (r, 1)
        loss = m + jnp.log(s_exp) - s_wx                          # (r, 1)
        # Mask rows of the (possibly ragged, unpadded) last block.
        grow = base + r0 + jax.lax.broadcasted_iota(jnp.int32, (r, 1), 0)
        loss = jnp.where(grow < n_rows, loss, 0.0)
        return jnp.sum(loss, axis=0, keepdims=True)               # (1, 1)

    n_chunks = tm // row_chunk
    if n_chunks == 1:
        total = chunk_loss_sum(0, tm)
    else:
        def body(i, acc):
            r0 = pl.multiple_of(i * row_chunk, row_chunk)
            return acc + chunk_loss_sum(r0, row_chunk)
        total = jax.lax.fori_loop(0, n_chunks, body,
                                  jnp.zeros((1, 1), jnp.float32),
                                  unroll=(n_chunks <= 4))

    # Lane-dense per-block output: one dense (8, 128) tile per grid step.
    o_ref[...] = jnp.broadcast_to(total, (1, 8, 128))


def label_smoothing_loss(x, target, smoothing=0.0, block_rows=None):
    """x: (N, C) float logits, target: (N,) int class indices. Returns f32 scalar."""
    n, c = x.shape
    confidence = 1.0 - smoothing
    itemsize = jnp.dtype(x.dtype).itemsize

    # dtype-aware sublane alignment: 8 (f32), 16 (bf16), 32 (int8/fp8).
    row_align = max(8, 32 // itemsize)

    # Per-generation VMEM budgets; conservative (v7x) fallback.
    try:
        vmem_cap = int(pltpu.get_tpu_info().vmem_capacity_bytes)
    except Exception:
        vmem_cap = 64 * 1024 * 1024
    if vmem_cap >= 100 * 1024 * 1024:          # v5e / v6e: 128 MiB physical
        block_budget = 16 * 1024 * 1024
        vmem_limit = 64 * 1024 * 1024
    else:                                       # v7x: 64 MiB per TensorCore
        block_budget = 8 * 1024 * 1024
        vmem_limit = 48 * 1024 * 1024

    def _round_up(a, b):
        return -(-a // b) * b

    if block_rows is None:
        tm = max(row_align,
                 (block_budget // max(1, c * itemsize)) // row_align * row_align)
        tm = min(tm, _round_up(n, row_align))
        # v7x megacore: prefer >= 2 grid blocks so the parallel axis shards.
        if tm >= n and n > row_align:
            tm = min(tm, _round_up(-(-n // 2), row_align))
    else:
        tm = _round_up(int(block_rows), row_align)
    tm = max(tm, row_align)

    # Inner row-chunk: bound each f32 intermediate to ~512 KiB.
    rc = ((1 << 19) // max(1, 4 * c)) // row_align * row_align
    rc = max(row_align, min(rc, tm))
    while tm % rc:
        rc -= row_align

    num_blocks = -(-n // tm)
    t2d = target.astype(jnp.int32).reshape(n, 1)

    kernel = functools.partial(
        _label_smoothing_kernel,
        confidence=confidence,
        smoothing=smoothing,
        n_rows=n,
        block_rows=tm,
        row_chunk=rc,
    )

    partials = pl.pallas_call(
        kernel,
        out_shape=jax.ShapeDtypeStruct((num_blocks, 8, 128), jnp.float32),
        grid=(num_blocks,),
        in_specs=[
            pl.BlockSpec((tm, c), lambda i: (i, 0)),
            pl.BlockSpec((tm, 1), lambda i: (i, 0)),
        ],
        out_specs=pl.BlockSpec((1, 8, 128), lambda i: (i, 0, 0)),
        compiler_params=pltpu.CompilerParams(
            dimension_semantics=("parallel",),
            vmem_limit_bytes=vmem_limit,
        ),
        cost_estimate=pl.CostEstimate(
            flops=8 * n * c,
            transcendentals=n * c + n,
            bytes_accessed=n * c * itemsize + n * 4 + num_blocks * 8 * 128 * 4,
        ),
    )(x, t2d)

    # One partial per block; divide by the true batch size.
    return jnp.sum(partials[:, 0, 0]) / n


def _reference(x, target, smoothing):
    logprobs = jax.nn.log_softmax(x.astype(jnp.float32), axis=-1)
    nll = -jnp.take_along_axis(logprobs, target[:, None], axis=-1)[:, 0]
    smooth = -jnp.mean(logprobs, axis=-1)
    return jnp.mean((1.0 - smoothing) * nll + smoothing * smooth)


if __name__ == "__main__":
    key = jax.random.PRNGKey(0)
    smoothing = 0.1

    # Case 1: small, single block, exact fit, f32.
    k1, k2, k3, k4 = jax.random.split(key, 4)
    N1, C1 = 8, 32
    x1 = jax.random.normal(k1, (N1, C1), dtype=jnp.float32)
    t1 = jax.random.randint(k2, (N1,), 0, C1, dtype=jnp.int32)
    out1 = jax.block_until_ready(label_smoothing_loss(x1, t1, smoothing=smoothing))
    ref1 = _reference(x1, t1, smoothing)
    assert jnp.allclose(out1, ref1, atol=1e-5, rtol=1e-5), (out1, ref1)

    # Case 2: multi-block grid, ragged (unpadded) last block, bf16 logits.
    N2, C2 = 20, 160
    x2 = jax.random.normal(k3, (N2, C2), dtype=jnp.bfloat16)
    t2 = jax.random.randint(k4, (N2,), 0, C2, dtype=jnp.int32)
    out2 = jax.block_until_ready(
        label_smoothing_loss(x2, t2, smoothing=smoothing, block_rows=8))
    ref2 = _reference(x2, t2, smoothing)
    assert jnp.allclose(out2, ref2, atol=1e-2, rtol=1e-2), (out2, ref2)

    print("KERNEL_OK")
</pallas_src>

<mosaic_0001>
module attributes {stable_mosaic.version = 11 : i64} {
  func.func @_label_smoothing_kernel(%arg0: i32, %arg1: memref<8x32xf32, #tpu.memory_space<vmem>>, %arg2: memref<8x1xi32, #tpu.memory_space<vmem>>, %arg3: memref<1x8x128xf32, #tpu.memory_space<vmem>>) attributes {dimension_semantics = [#tpu.dimension_semantics<parallel>], iteration_bounds = array<i64: 1>, scalar_prefetch = 0 : i64, scratch_operands = 0 : i64, tpu.core_type = #tpu.core_type<tc>, window_params = [{transform_indices = @transform_0, window_bounds = array<i64: 8, 32>}, {transform_indices = @transform_1, window_bounds = array<i64: 8, 1>}, {transform_indices = @transform_2, window_bounds = array<i64: 1, 8, 128>}]} {
    %c8_i32 = arith.constant 8 : i32
    %0 = arith.muli %arg0, %c8_i32 : i32
    %c0 = arith.constant 0 : index
    %c0_0 = arith.constant 0 : index
    %1 = vector.load %arg1[%c0, %c0_0] : memref<8x32xf32, #tpu.memory_space<vmem>>, vector<8x32xf32>
    %c0_1 = arith.constant 0 : index
    %c0_2 = arith.constant 0 : index
    %2 = vector.load %arg2[%c0_1, %c0_2] : memref<8x1xi32, #tpu.memory_space<vmem>>, vector<8x1xi32>
    %cst = arith.constant dense<0xFF800000> : vector<8xf32>
    %3 = vector.multi_reduction <maximumf>, %1, %cst [1] : vector<8x32xf32> to vector<8xf32>
    %4 = vector.shape_cast %3 : vector<8xf32> to vector<8x1xf32>
    %5 = tpu.iota {dimensions = array<i32: 1>} : vector<8x32xi32>
    %6 = vector.broadcast %2 : vector<8x1xi32> to vector<8x32xi32>
    %7 = arith.cmpi eq, %5, %6 : vector<8x32xi32>
    %cst_3 = arith.constant 0.903124988 : f32
    %cst_4 = arith.constant 3.125000e-03 : f32
    %8 = vector.broadcast %cst_3 : f32 to vector<8x32xf32>
    %9 = vector.broadcast %cst_4 : f32 to vector<8x32xf32>
    %10 = arith.select %7, %8, %9 : vector<8x32xi1>, vector<8x32xf32>
    %11 = vector.broadcast %4 : vector<8x1xf32> to vector<8x32xf32>
    %12 = arith.subf %1, %11 : vector<8x32xf32>
    %13 = math.exp %12 : vector<8x32xf32>
    %cst_5 = arith.constant dense<0.000000e+00> : vector<8xf32>
    %14 = vector.multi_reduction <add>, %13, %cst_5 [1] : vector<8x32xf32> to vector<8xf32>
    %15 = vector.shape_cast %14 : vector<8xf32> to vector<8x1xf32>
    %16 = arith.mulf %10, %1 : vector<8x32xf32>
    %cst_6 = arith.constant dense<0.000000e+00> : vector<8xf32>
    %17 = vector.multi_reduction <add>, %16, %cst_6 [1] : vector<8x32xf32> to vector<8xf32>
    %18 = vector.shape_cast %17 : vector<8xf32> to vector<8x1xf32>
    %19 = math.log %15 : vector<8x1xf32>
    %20 = arith.addf %4, %19 : vector<8x1xf32>
    %21 = arith.subf %20, %18 : vector<8x1xf32>
    %c0_i32 = arith.constant 0 : i32
    %22 = arith.addi %0, %c0_i32 : i32
    %23 = tpu.iota {dimensions = array<i32: 0>} : vector<8x1xi32>
    %24 = vector.broadcast %22 : i32 to vector<8x1xi32>
    %25 = arith.addi %24, %23 : vector<8x1xi32>
    %c8_i32_7 = arith.constant 8 : i32
    %26 = vector.broadcast %c8_i32_7 : i32 to vector<8x1xi32>
    %27 = arith.cmpi slt, %25, %26 : vector<8x1xi32>
    %cst_8 = arith.constant 0.000000e+00 : f32
    %28 = vector.broadcast %cst_8 : f32 to vector<8x1xf32>
    %29 = arith.select %27, %21, %28 : vector<8x1xi1>, vector<8x1xf32>
    %cst_9 = arith.constant dense<0.000000e+00> : vector<1xf32>
    %30 = vector.multi_reduction <add>, %29, %cst_9 [0] : vector<8x1xf32> to vector<1xf32>
    %31 = vector.shape_cast %30 : vector<1xf32> to vector<1x1xf32>
    %32 = vector.shape_cast %31 : vector<1x1xf32> to vector<1x1x1xf32>
    %33 = vector.broadcast %32 : vector<1x1x1xf32> to vector<1x8x128xf32>
    %c0_10 = arith.constant 0 : index
    %c0_11 = arith.constant 0 : index
    %c0_12 = arith.constant 0 : index
    %34 = vector.load %arg3[%c0_10, %c0_11, %c0_12] : memref<1x8x128xf32, #tpu.memory_space<vmem>>, vector<1x8x128xf32>
    tpu.vector_store %arg3[%c0_10, %c0_11, %c0_12], %33 {strides = array<i32>} : memref<1x8x128xf32, #tpu.memory_space<vmem>>, vector<1x8x128xf32>,
    return
  }
  func.func @transform_0(%arg0: i32) -> (i32, i32) {
    %c0_i32 = arith.constant 0 : i32
    %c0_i32_0 = arith.constant 0 : i32
    return %arg0, %c0_i32 : i32, i32
  }
  func.func @transform_1(%arg0: i32) -> (i32, i32) {
    %c0_i32 = arith.constant 0 : i32
    %c0_i32_0 = arith.constant 0 : i32
    return %arg0, %c0_i32 : i32, i32
  }
  func.func @transform_2(%arg0: i32) -> (i32, i32, i32) {
    %c0_i32 = arith.constant 0 : i32
    %c0_i32_0 = arith.constant 0 : i32
    %c0_i32_1 = arith.constant 0 : i32
    return %arg0, %c0_i32, %c0_i32_0 : i32, i32, i32
  }
}

</mosaic_0001>

<llo_original>
// kernel: tpu_custom_call.1
$region0: #{tpu_custom_call.1}
  #allocation0 [shape = 'u32[]', space=smem, size = 0x4, offset = 0x4, fixed_abs, tag = 'smem constant byte address 0x4 - core index']
  #allocation1 [shape = 'u32[144,128]{1,0:T(1,128)}', space=vmem, size = 0x12000, scoped, tag = 'internal scratch']
  %s0 = inlined_call_operand.vmem [shape: f32[8,32], index: 0, kind: input, shape index: {}]
  %s1 = inlined_call_operand.vmem [shape: s32[8,1], index: 1, kind: input, shape index: {}]
  %s2 = inlined_call_operand.hbm [shape: f32[1,8,128], index: 2, kind: output, shape index: {}]
  %s3 = sld [smem:[#allocation0]]
  $region18: #{tpu_custom_call.1} parent=0
    _
  %s5 = ssub.s32 1, %s3
  %s6 = scalar_select 0, %s5, %s3
  $region1: #{tpu_custom_call.1} parent=0
    #allocation2 [shape = 'u8[4096]{0}', space=vmem, size = 0x1000, scoped, tag = 'output window, operand 0, single buffered']
    #allocation3 [shape = 's32[1]{0}', space=sflag, size = 0x4, scoped, tag = 'scoped memory for tpu_custom_call.1']
    %7 = vsyncpa [#allocation3], 0
    // Predicated region
    $region2: #{tpu_custom_call.1} parent=1 // pred_check
      _
    $region3: #{tpu_custom_call.1} parent=1 // pred_check_branch
      %9 = sbr.rel (0) target = $region5
    $region4: #{tpu_custom_call.1} parent=1 // pred_region
      _
    $region5: #{tpu_custom_call.1} parent=1 // pred_fallthru
      _
    // Predicated region
    $region6: #{tpu_custom_call.1} parent=1 // pred_check
      _
    $region7: #{tpu_custom_call.1} parent=1 // pred_check_branch
      %11 = sbr.rel (0) target = $region9
    $region8: #{tpu_custom_call.1} parent=1 // pred_region
      _
    $region9: #{tpu_custom_call.1} parent=1 // pred_fallthru
      _
    %s12 = smul.u32 0, 8
    %v13 = vld [vmem:[%s0] sm:$0xff]
    %v14 = vld [vmem:[%s1] sm:$0xff]
    %vm15 = vcmask 261120
    %v16 = vsel %vm15, %v13, -inf
    %17 = vmax.xlane.f32.xlu0 %v16
    %v18 = vpop.xlane.xlu0 %17
    %v19 = vlaneseq
    %v20 = vand.u32 %v19, 127
    %21 = vset.pattern.permute.xlu0 0
    %22 = vperm.xlu0 %21, %v14
    %v23 = vpop.permute.xlu0 %22
    %vm24 = vcmp.eq.s32.totalorder %v20, %v23
    %v25 = vsel %vm24, 0.903125, 0.003125
    %v26 = vsub.f32 %v13, %v18
    %v27 = vmul.f32 %v26, 1.442695
    %v28 = vpow.pop %v27
    %v29 = vsel %vm15, %v28, 0.0
    %30 = vadd.xlane.f32.xlu0 %v29
    %v31 = vpop.xlane.xlu0 %30
    %v32 = vmul.f32 %v25, %v13
    %v33 = vsel %vm15, %v32, 0.0
    %34 = vadd.xlane.f32.xlu0 %v33
    %v35 = vpop.xlane.xlu0 %34
    %v36 = vlog2.pop %v31
    %v37 = vmul.f32 %v36, 0.6931472
    %v38 = vadd.f32 %v18, %v37
    %v39 = vsub.f32 %v38, %v35
    %v40 = vlaneseq
    %v41 = vshrl.u32 %v40, 7
    %v42 = vstv %s12
    %v43 = vadd.s32 %v42, %v41
    %vm44 = vcmp.lt.s32.totalorder %v43, 8
    %v45 = vsel %vm44, %v39, 0.0
    %v46 = vrot.slane %v45, 4
    %v47 = vadd.f32 %v45, %v46
    %v48 = vrot.slane %v47, 2
    %v49 = vadd.f32 %v47, %v48
    %v50 = vrot.slane %v49, 1
    %v51 = vadd.f32 %v49, %v50
    %52 = vst [vmem:[#allocation2] sm:$0xff] %v51
    // Predicated region
    $region10: #{tpu_custom_call.1} parent=1 // pred_check
      _
    $region11: #{tpu_custom_call.1} parent=1 // pred_check_branch
      %54 = sbr.rel (0) target = $region13
    $region12: #{tpu_custom_call.1} parent=1 // pred_region
      %s56 = ssub.s32 128, 128
      %57 = vsyncadd [#allocation3], %s56
      %s59 = sshll.u32 [#allocation2], 4
      %s60 = int_to_ptr.vmem [resolvable:$true] %s59
      %62 = dma.vmem_to_hbm [thread:$0]  %s60, 128, %s2, [#allocation3]
    $region13: #{tpu_custom_call.1} parent=1 // pred_fallthru
      _
    // Predicated region
    $region14: #{tpu_custom_call.1} parent=1 // pred_check
      _
    $region15: #{tpu_custom_call.1} parent=1 // pred_check_branch
      %64 = sbr.rel (0) target = $region17
    $region16: #{tpu_custom_call.1} parent=1 // pred_region
      %65 = dma.done [#allocation3], 128
    $region17: #{tpu_custom_call.1} parent=1 // pred_fallthru
      _
    %66 = vsyncpa [#allocation3], 1

</llo_original>
